<compile_context>
chip_gen: v7x
topology: tpu7x:2x2x1
jax: 0.10.0
libtpu: 0.0.40
codegen_flags: <defaults>
</compile_context>

<pallas_src>
import functools

import jax
import jax.numpy as jnp
from jax.experimental import pallas as pl
from jax.experimental.pallas import tpu as pltpu

_SUBLANE = 8
_LANE = 128
_TARGET_BLOCK_BYTES = 4 * 1024 * 1024   # per-input HBM bytes per grid step


def _round_up(a, b):
    return -(-a // b) * b


def _vmem_budgets():
    """Generation-aware scoped-VMEM limit and input-block budget."""
    try:
        cap = pltpu.get_tpu_info().vmem_capacity_bytes
    except Exception:
        cap = 128 * 1024 * 1024
    # 64 MiB on v5e/v6e (128 MiB physical), 32 MiB on v7x (64 MiB physical).
    limit = int(min(cap // 2, 64 * 1024 * 1024))
    budget = (limit * 3) // 4            # headroom for compiler scratch
    return limit, budget


def _pick_block_b(batch, num_classes, in_itemsize, vmem_budget):
    """Largest multiple-of-8 batch tile that fits the VMEM budget, sized so each
    input block moves >= ~4 MiB of HBM traffic per grid step."""
    lane_c = _round_up(num_classes, _LANE)          # lane-padded VMEM width
    # Per-row VMEM bytes: 2 inputs x 2 pipeline buffers at the HBM dtype
    # (lane-padded) + ~3 live full-width f32 temporaries in the kernel body
    # + the double-buffered (block_b, 1) f32 output block (lane-padded to 128).
    per_row = lane_c * (2 * 2 * in_itemsize + 3 * 4) + 2 * _LANE * 4
    fit_rows = max(vmem_budget // per_row, _SUBLANE)
    # Rows needed so that each input block transfers >= _TARGET_BLOCK_BYTES of
    # actual (un-padded) HBM bytes -> step overhead <~ 5-10% of DMA time.
    target_rows = max(_TARGET_BLOCK_BYTES // max(num_classes * in_itemsize, 1),
                      _SUBLANE)
    block_b = min(fit_rows, target_rows)
    block_b = max(_SUBLANE, (block_b // _SUBLANE) * _SUBLANE)
    block_b = min(block_b, _round_up(batch, _SUBLANE))
    return block_b


def _ce_rows_kernel(x_ref, y_ref, loss_ref, *, batch, block_b):
    """Per-row soft-target CE for one (block_b, C) tile -> (block_b, 1) f32."""
    x = x_ref[...].astype(jnp.float32)
    y = y_ref[...].astype(jnp.float32)
    # numerically stable logsumexp along the class (lane) axis
    m = jnp.max(x, axis=-1, keepdims=True)                          # (tb, 1)
    lse = m + jnp.log(jnp.sum(jnp.exp(x - m), axis=-1, keepdims=True))
    # sum_c(-y * log_softmax(x)) == sum_c(y * (lse - x)); this form avoids the
    # cancellation of lse*sum(y) - sum(y*x) when |x| is large.
    loss = jnp.sum(y * (lse - x), axis=-1, keepdims=True)           # (tb, 1)
    # Mask rows past the true batch: the trailing rows of the last partial tile
    # hold undefined data (possibly Inf/NaN) -- do NOT rely on y == 0 algebra.
    row = (pl.program_id(0) * block_b
           + jax.lax.broadcasted_iota(jnp.int32, (block_b, 1), 0))
    loss_ref[...] = jnp.where(row < batch, loss, 0.0)


def soft_target_cross_entropy(x, y, reduction="mean", *, block_b=None):
    """Pallas implementation of SoftTargetCrossEntropy._forward (x, y: (B, C))."""
    assert x.shape == y.shape and x.ndim == 2
    B, C = x.shape

    vmem_limit, vmem_budget = _vmem_budgets()
    if block_b is None:
        block_b = _pick_block_b(B, C, jnp.dtype(x.dtype).itemsize, vmem_budget)
    assert block_b % _SUBLANE == 0 and block_b > 0

    grid = (pl.cdiv(B, block_b),)        # no wrapper-side padding
    in_specs = [
        pl.BlockSpec((block_b, C), lambda i: (i, 0)),
        pl.BlockSpec((block_b, C), lambda i: (i, 0)),
    ]
    # NOTE: a lane-dense (1, B) output would cut masked vst count further on
    # v5e, but the output is B*4 bytes vs. B*C*itemsize read, so the column
    # layout is kept (known-robust, no in-kernel relayout needed).
    per_sample = pl.pallas_call(
        functools.partial(_ce_rows_kernel, batch=B, block_b=block_b),
        out_shape=jax.ShapeDtypeStruct((B, 1), jnp.float32),
        grid_spec=pltpu.PrefetchScalarGridSpec(
            num_scalar_prefetch=0,
            grid=grid,
            in_specs=in_specs,
            out_specs=pl.BlockSpec((block_b, 1), lambda i: (i, 0)),
        ),
        compiler_params=pltpu.CompilerParams(
            dimension_semantics=("parallel",),   # independent tiles -> dual TC on v7x
            vmem_limit_bytes=vmem_limit,
        ),
    )(x, y)

    loss = per_sample[:, 0]
    if reduction == "mean":
        # Tiny second reduction over B floats; negligible vs. the (B, C) stream
        # and it keeps the grid fully parallel (no resident accumulator).
        return jnp.mean(loss)
    elif reduction == "none":
        return loss
    else:
        raise NotImplementedError


def soft_target_cross_entropy_forward(logits, labels, reduction="mean"):
    """Mirrors SoftTargetCrossEntropy.forward's dict / list-of-logits handling."""
    if isinstance(logits, (list, tuple)):
        return {
            "soft_target_cross_entropy_loss" + str(idx):
                soft_target_cross_entropy(x_i, labels, reduction)
            for idx, x_i in enumerate(logits)
        }
    return {"soft_target_cross_entropy_loss":
            soft_target_cross_entropy(logits, labels, reduction)}


def _reference(x, y, reduction="mean"):
    log_probs = jax.nn.log_softmax(x.astype(jnp.float32), axis=-1)
    loss = jnp.sum(-y.astype(jnp.float32) * log_probs, axis=-1)
    return jnp.mean(loss) if reduction == "mean" else loss


if __name__ == "__main__":
    key = jax.random.PRNGKey(0)
    k_logits, k_labels = jax.random.split(key)

    B, C = 16, 32  # small shapes: batch=16, num_classes=32
    logits = jax.random.normal(k_logits, (B, C), dtype=jnp.float32)
    # soft targets (e.g. mixup-style): rows sum to 1
    labels = jax.nn.softmax(jax.random.normal(k_labels, (B, C), dtype=jnp.float32), axis=-1)

    # reduction='mean' (module default)
    loss_mean = jax.block_until_ready(soft_target_cross_entropy(logits, labels, "mean"))
    assert jnp.allclose(loss_mean, _reference(logits, labels, "mean"), atol=1e-5, rtol=1e-5)

    # reduction='none'
    loss_none = jax.block_until_ready(soft_target_cross_entropy(logits, labels, "none"))
    assert jnp.allclose(loss_none, _reference(logits, labels, "none"), atol=1e-5, rtol=1e-5)

    # bf16 inputs stay bf16 in HBM; upcast happens in-kernel
    loss_bf16 = jax.block_until_ready(
        soft_target_cross_entropy(logits.astype(jnp.bfloat16),
                                  labels.astype(jnp.bfloat16), "mean"))
    ref_bf16 = _reference(logits.astype(jnp.bfloat16), labels.astype(jnp.bfloat16), "mean")
    assert jnp.allclose(loss_bf16, ref_bf16, atol=1e-4, rtol=1e-4)

    # non-aligned batch + forced small tile: multi-block grid with a masked
    # partial last tile (no wrapper-side padding anymore)
    B2, C2 = 20, 48
    logits2 = jax.random.normal(k_logits, (B2, C2), dtype=jnp.float32)
    labels2 = jax.nn.softmax(jax.random.normal(k_labels, (B2, C2), dtype=jnp.float32), axis=-1)
    loss2_mean = jax.block_until_ready(
        soft_target_cross_entropy(logits2, labels2, "mean", block_b=8))
    assert jnp.allclose(loss2_mean, _reference(logits2, labels2, "mean"), atol=1e-5, rtol=1e-5)
    loss2_none = jax.block_until_ready(
        soft_target_cross_entropy(logits2, labels2, "none", block_b=8))
    assert jnp.allclose(loss2_none, _reference(logits2, labels2, "none"), atol=1e-5, rtol=1e-5)

    # module-style forward (dict output), including list-of-logits dispatch
    d = soft_target_cross_entropy_forward([logits, logits], labels, "mean")
    assert jnp.allclose(jax.block_until_ready(d["soft_target_cross_entropy_loss1"]),
                        _reference(logits, labels, "mean"), atol=1e-5, rtol=1e-5)

    print("KERNEL_OK")
</pallas_src>

<mosaic_0001>
module attributes {stable_mosaic.version = 11 : i64} {
  func.func @_ce_rows_kernel(%arg0: i32, %arg1: memref<16x32xf32, #tpu.memory_space<vmem>>, %arg2: memref<16x32xf32, #tpu.memory_space<vmem>>, %arg3: memref<16x1xf32, #tpu.memory_space<vmem>>) attributes {dimension_semantics = [#tpu.dimension_semantics<parallel>], iteration_bounds = array<i64: 1>, scalar_prefetch = 0 : i64, scratch_operands = 0 : i64, tpu.core_type = #tpu.core_type<tc>, window_params = [{transform_indices = @transform_0, window_bounds = array<i64: 16, 32>}, {transform_indices = @transform_1, window_bounds = array<i64: 16, 32>}, {transform_indices = @transform_2, window_bounds = array<i64: 16, 1>}]} {
    %c0 = arith.constant 0 : index
    %c0_0 = arith.constant 0 : index
    %0 = vector.load %arg1[%c0, %c0_0] : memref<16x32xf32, #tpu.memory_space<vmem>>, vector<16x32xf32>
    %c0_1 = arith.constant 0 : index
    %c0_2 = arith.constant 0 : index
    %1 = vector.load %arg2[%c0_1, %c0_2] : memref<16x32xf32, #tpu.memory_space<vmem>>, vector<16x32xf32>
    %cst = arith.constant dense<0xFF800000> : vector<16xf32>
    %2 = vector.multi_reduction <maximumf>, %0, %cst [1] : vector<16x32xf32> to vector<16xf32>
    %3 = vector.shape_cast %2 : vector<16xf32> to vector<16x1xf32>
    %4 = vector.broadcast %3 : vector<16x1xf32> to vector<16x32xf32>
    %5 = arith.subf %0, %4 : vector<16x32xf32>
    %6 = math.exp %5 : vector<16x32xf32>
    %cst_3 = arith.constant dense<0.000000e+00> : vector<16xf32>
    %7 = vector.multi_reduction <add>, %6, %cst_3 [1] : vector<16x32xf32> to vector<16xf32>
    %8 = vector.shape_cast %7 : vector<16xf32> to vector<16x1xf32>
    %9 = math.log %8 : vector<16x1xf32>
    %10 = arith.addf %3, %9 : vector<16x1xf32>
    %11 = vector.broadcast %10 : vector<16x1xf32> to vector<16x32xf32>
    %12 = arith.subf %11, %0 : vector<16x32xf32>
    %13 = arith.mulf %1, %12 : vector<16x32xf32>
    %cst_4 = arith.constant dense<0.000000e+00> : vector<16xf32>
    %14 = vector.multi_reduction <add>, %13, %cst_4 [1] : vector<16x32xf32> to vector<16xf32>
    %15 = vector.shape_cast %14 : vector<16xf32> to vector<16x1xf32>
    %c16_i32 = arith.constant 16 : i32
    %16 = arith.muli %arg0, %c16_i32 : i32
    %17 = tpu.iota {dimensions = array<i32: 0>} : vector<16x1xi32>
    %18 = vector.broadcast %16 : i32 to vector<16x1xi32>
    %19 = arith.addi %18, %17 : vector<16x1xi32>
    %c16_i32_5 = arith.constant 16 : i32
    %20 = vector.broadcast %c16_i32_5 : i32 to vector<16x1xi32>
    %21 = arith.cmpi slt, %19, %20 : vector<16x1xi32>
    %cst_6 = arith.constant 0.000000e+00 : f32
    %22 = vector.broadcast %cst_6 : f32 to vector<16x1xf32>
    %23 = arith.select %21, %15, %22 : vector<16x1xi1>, vector<16x1xf32>
    %c0_7 = arith.constant 0 : index
    %c0_8 = arith.constant 0 : index
    %24 = vector.load %arg3[%c0_7, %c0_8] : memref<16x1xf32, #tpu.memory_space<vmem>>, vector<16x1xf32>
    tpu.vector_store %arg3[%c0_7, %c0_8], %23 {strides = array<i32>} : memref<16x1xf32, #tpu.memory_space<vmem>>, vector<16x1xf32>,
    return
  }
  func.func @transform_0(%arg0: i32) -> (i32, i32) {
    %c0_i32 = arith.constant 0 : i32
    %c0_i32_0 = arith.constant 0 : i32
    return %arg0, %c0_i32 : i32, i32
  }
  func.func @transform_1(%arg0: i32) -> (i32, i32) {
    %c0_i32 = arith.constant 0 : i32
    %c0_i32_0 = arith.constant 0 : i32
    return %arg0, %c0_i32 : i32, i32
  }
  func.func @transform_2(%arg0: i32) -> (i32, i32) {
    %c0_i32 = arith.constant 0 : i32
    %c0_i32_0 = arith.constant 0 : i32
    return %arg0, %c0_i32 : i32, i32
  }
}

</mosaic_0001>

<llo_original>
// kernel: tpu_custom_call.1
$region0: #{tpu_custom_call.1}
  #allocation0 [shape = 'u32[]', space=smem, size = 0x4, offset = 0x4, fixed_abs, tag = 'smem constant byte address 0x4 - core index']
  #allocation1 [shape = 'u32[144,128]{1,0:T(1,128)}', space=vmem, size = 0x12000, scoped, tag = 'internal scratch']
  %s0 = inlined_call_operand.hbm [shape: f32[16,32], index: 0, kind: input, shape index: {}]
  %s1 = inlined_call_operand.hbm [shape: f32[16,32], index: 1, kind: input, shape index: {}]
  %s2 = inlined_call_operand.hbm [shape: f32[16,1], index: 2, kind: output, shape index: {}]
  %s3 = sld [smem:[#allocation0]]
  $region26: #{tpu_custom_call.1} parent=0
    _
  %s5 = ssub.s32 1, %s3
  %s6 = scalar_select 0, %s5, %s3
  $region1: #{tpu_custom_call.1} parent=0
    #allocation2 [shape = 'u8[8192]{0}', space=vmem, size = 0x2000, scoped, tag = 'input window, operand 0, single buffered']
    #allocation3 [shape = 's32[1]{0}', space=sflag, size = 0x4, scoped, tag = 'scoped memory for tpu_custom_call.1']
    #allocation4 [shape = 's32[1]{0}', space=sflag, size = 0x4, scoped, tag = 'scoped memory for tpu_custom_call.1']
    #allocation5 [shape = 'u8[8192]{0}', space=vmem, size = 0x2000, scoped, tag = 'input window, operand 1, single buffered']
    #allocation6 [shape = 's32[1]{0}', space=sflag, size = 0x4, scoped, tag = 'scoped memory for tpu_custom_call.1']
    #allocation7 [shape = 'u8[8192]{0}', space=vmem, size = 0x2000, scoped, tag = 'output window, operand 0, single buffered']
    %7 = vsyncpa [#allocation3], 0
    %8 = vsyncpa [#allocation6], 0
    %9 = vsyncpa [#allocation4], 0
    // Predicated region
    $region2: #{tpu_custom_call.1} parent=1 // pred_check
      _
    $region3: #{tpu_custom_call.1} parent=1 // pred_check_branch
      %11 = sbr.rel (0) target = $region5
    $region4: #{tpu_custom_call.1} parent=1 // pred_region
      %s13 = ssub.s32 256, 256
      %14 = vsyncadd [#allocation3], %s13
      %s15 = sshll.u32 [#allocation2], 4
      %s16 = int_to_ptr.vmem [resolvable:$true] %s15
      %21 = dma.hbm_to_vmem [thread:$0]  %s0, 256, %s16, [#allocation3], 128, 128, 8
    $region5: #{tpu_custom_call.1} parent=1 // pred_fallthru
      _
    // Predicated region
    $region6: #{tpu_custom_call.1} parent=1 // pred_check
      _
    $region7: #{tpu_custom_call.1} parent=1 // pred_check_branch
      %23 = sbr.rel (0) target = $region9
    $region8: #{tpu_custom_call.1} parent=1 // pred_region
      %s25 = ssub.s32 256, 256
      %26 = vsyncadd [#allocation6], %s25
      %s27 = sshll.u32 [#allocation5], 4
      %s28 = int_to_ptr.vmem [resolvable:$true] %s27
      %33 = dma.hbm_to_vmem [thread:$0]  %s1, 256, %s28, [#allocation6], 128, 128, 8
    $region9: #{tpu_custom_call.1} parent=1 // pred_fallthru
      _
    // Predicated region
    $region10: #{tpu_custom_call.1} parent=1 // pred_check
      _
    $region11: #{tpu_custom_call.1} parent=1 // pred_check_branch
      %35 = sbr.rel (0) target = $region13
    $region12: #{tpu_custom_call.1} parent=1 // pred_region
      %36 = dma.done [#allocation3], 256
    $region13: #{tpu_custom_call.1} parent=1 // pred_fallthru
      _
    // Predicated region
    $region14: #{tpu_custom_call.1} parent=1 // pred_check
      _
    $region15: #{tpu_custom_call.1} parent=1 // pred_check_branch
      %38 = sbr.rel (0) target = $region17
    $region16: #{tpu_custom_call.1} parent=1 // pred_region
      %39 = dma.done [#allocation6], 256
    $region17: #{tpu_custom_call.1} parent=1 // pred_fallthru
      _
    %v40 = vld [vmem:[#allocation2] sm:$0xff]
    %v41 = vld [vmem:[#allocation2 + $0x8] sm:$0xff]
    %v42 = vld [vmem:[#allocation5] sm:$0xff]
    %v43 = vld [vmem:[#allocation5 + $0x8] sm:$0xff]
    %vm44 = vcmask 261120
    %v45 = vsel %vm44, %v40, -inf
    %46 = vmax.xlane.f32.xlu0 %v45
    %v47 = vpop.xlane.xlu0 %46
    %v48 = vsel %vm44, %v41, -inf
    %49 = vmax.xlane.f32.xlu0 %v48
    %v50 = vpop.xlane.xlu0 %49
    %v51 = vsub.f32 %v40, %v47
    %v52 = vsub.f32 %v41, %v50
    %v53 = vmul.f32 %v51, 1.442695
    %v54 = vpow.pop %v53
    %v55 = vmul.f32 %v52, 1.442695
    %v56 = vpow.pop %v55
    %v57 = vsel %vm44, %v54, 0.0
    %58 = vadd.xlane.f32.xlu0 %v57
    %v59 = vpop.xlane.xlu0 %58
    %v60 = vsel %vm44, %v56, 0.0
    %61 = vadd.xlane.f32.xlu0 %v60
    %v62 = vpop.xlane.xlu0 %61
    %v63 = vlog2.pop %v59
    %v64 = vmul.f32 %v63, 0.6931472
    %v65 = vlog2.pop %v62
    %v66 = vmul.f32 %v65, 0.6931472
    %v67 = vadd.f32 %v47, %v64
    %v68 = vadd.f32 %v50, %v66
    %v69 = vsub.f32 %v67, %v40
    %v70 = vsub.f32 %v68, %v41
    %v71 = vmul.f32 %v42, %v69
    %v72 = vmul.f32 %v43, %v70
    %v73 = vsel %vm44, %v71, 0.0
    %74 = vadd.xlane.f32.xlu0 %v73
    %v75 = vpop.xlane.xlu0 %74
    %v76 = vsel %vm44, %v72, 0.0
    %77 = vadd.xlane.f32.xlu0 %v76
    %v78 = vpop.xlane.xlu0 %77
    %s79 = smul.u32 0, 16
    %v80 = vlaneseq
    %v81 = vshrl.u32 %v80, 7
    %v82 = vadd.s32 %v81, 8
    %v83 = vstv %s79
    %v84 = vadd.s32 %v83, %v81
    %v85 = vadd.s32 %v83, %v82
    %vm86 = vcmp.lt.s32.totalorder %v84, 16
    %vm87 = vcmp.lt.s32.totalorder %v85, 16
    %v88 = vsel %vm86, %v75, 0.0
    %v89 = vsel %vm87, %v78, 0.0
    %vm90 = vcmask 7168
    %91 = vst.msk [vmem:[#allocation7] sm:$0xff] %vm90, %v88
    %92 = vst.msk [vmem:[#allocation7 + $0x8] sm:$0xff] %vm90, %v89
    // Predicated region
    $region18: #{tpu_custom_call.1} parent=1 // pred_check
      _
    $region19: #{tpu_custom_call.1} parent=1 // pred_check_branch
      %94 = sbr.rel (0) target = $region21
    $region20: #{tpu_custom_call.1} parent=1 // pred_region
      %s96 = ssub.s32 256, 256
      %97 = vsyncadd [#allocation4], %s96
      %s98 = sshll.u32 [#allocation7], 4
      %s99 = int_to_ptr.vmem [resolvable:$true] %s98
      %104 = dma.vmem_to_hbm [thread:$0]  %s99, 256, %s2, [#allocation4], 128, 128, 8
    $region21: #{tpu_custom_call.1} parent=1 // pred_fallthru
      _
    // Predicated region
    $region22: #{tpu_custom_call.1} parent=1 // pred_check
      _
    $region23: #{tpu_custom_call.1} parent=1 // pred_check_branch
      %106 = sbr.rel (0) target = $region25
    $region24: #{tpu_custom_call.1} parent=1 // pred_region
      %107 = dma.done [#allocation4], 256
    $region25: #{tpu_custom_call.1} parent=1 // pred_fallthru
      _
    %108 = vsyncpa [#allocation3], 1
    %109 = vsyncpa [#allocation6], 1
    %110 = vsyncpa [#allocation4], 1

</llo_original>
